<compile_context>
chip_gen: v7x
topology: tpu7x:2x2x1
jax: 0.10.0
libtpu: 0.0.40
codegen_flags: <defaults>
</compile_context>

<pallas_src>
import functools

import jax
import jax.numpy as jnp
from jax.experimental import pallas as pl
from jax.experimental.pallas import tpu as pltpu


def _pwm_sum_kernel(x_ref, w_ref, o_ref, *, K, T):
    """scoring='sum' path.

    x_ref: (TN, 4, L) f32 input tile (NCW, lane axis = sequence position).
    w_ref: (4K, TG)   f32 combined (forward + reverse-complement) weights,
                      contraction index flattened as k*4 + c.
    o_ref: (TN, TG)   f32 output tile (lane-dense, TG multiple of 128).
    """
    x = x_ref[...]
    # Windowed sums S2[n, k*4 + c] = sum_{t < T} x[n, c, t + k].
    # Static unroll over the K PWM taps (K is small for PWMs; switch to
    # lax.fori_loop(..., unroll=True) if K ever gets large).
    S2 = jnp.concatenate(
        [jnp.sum(x[:, :, k:k + T], axis=2) for k in range(K)], axis=1)  # (TN, 4K)
    # One tiny MXU matmul finishes the job.
    o_ref[...] = jnp.dot(S2, w_ref[...], preferred_element_type=jnp.float32)


def _pwm_max_kernel(x_ref, w_ref, o_ref, *, K, T):
    """scoring='max' path (im2col + MXU matmul).

    x_ref: (TN, 4, L)     f32 input tile.
    w_ref: (2, TG, 4K)    f32 weights: [0] = forward strand, [1] = reverse
                          complement; contraction index flattened as k*4 + c.
    o_ref: (TN, TG)       f32 output tile.
    """
    x = x_ref[...]
    TN = x.shape[0]
    TG = w_ref.shape[1]
    # im2col along the sublane axis: cols[n, k*4 + c, t] = x[n, c, t + k].
    cols = jnp.concatenate([x[:, :, k:k + T] for k in range(K)], axis=1)  # (TN, 4K, T)
    # Rows [0:TG] = forward weights, rows [TG:2TG] = reverse-complement weights.
    wboth = w_ref[...].reshape(2 * TG, 4 * K)
    rows = []
    for n in range(TN):  # static unroll; TN is kept small (8)
        s = jnp.dot(wboth, cols[n], preferred_element_type=jnp.float32)   # (2TG, T)
        m = jnp.max(s, axis=1)                                            # (2TG,)
        rows.append(jnp.maximum(m[:TG], m[TG:]))                          # (TG,)
    o_ref[...] = jnp.stack(rows, axis=0)                                  # (TN, TG)


def pwm_forward(x, pwms, scoring='sum', *, tn=8, tg=128):
    """Pallas equivalent of PWM.forward.

    x:    (N, 4, L) float32  -- sequence batch in NCW layout (as PyTorch Conv1d).
    pwms: (G, 4, K) float32  -- grouped conv1d weights (bias is zero).
    returns (N, G) float32.
    """
    x = x.astype(jnp.float32)
    pwms = pwms.astype(jnp.float32)
    N, C, L = x.shape
    G, Cw, K = pwms.shape
    assert C == 4 and Cw == 4 and K <= L
    T = L - K + 1  # Conv1d output length (no padding, stride 1)

    # Reverse complement folded into the weights: w_rc[g,c,k] = pwms[g, 3-c, K-1-k].
    # Scoring the flipped input with w equals scoring x with w_rc (up to a reversal
    # of t, which is irrelevant under sum/max).
    w_rc = jnp.flip(jnp.flip(pwms, axis=1), axis=2)

    # Padding: batch to a multiple of tn, PWM count to a lane-dense multiple of tg.
    Np = pl.cdiv(N, tn) * tn
    Gp = pl.cdiv(G, tg) * tg
    x_p = jnp.pad(x, ((0, Np - N), (0, 0), (0, 0)))

    grid = (Np // tn, Gp // tg)

    if scoring == 'max':
        w_f = jnp.pad(pwms, ((0, Gp - G), (0, 0), (0, 0)))
        w_r = jnp.pad(w_rc, ((0, Gp - G), (0, 0), (0, 0)))
        w2 = jnp.stack([w_f, w_r], axis=0)                           # (2, Gp, 4, K)
        w2 = jnp.transpose(w2, (0, 1, 3, 2)).reshape(2, Gp, 4 * K)   # flat idx k*4+c
        kernel = functools.partial(_pwm_max_kernel, K=K, T=T)
        w_spec = pl.BlockSpec((2, tg, 4 * K), lambda i, j: (0, j, 0))
        w_arg = w2
    else:
        # sum scoring: fwd + rc strands collapse into a single weight tensor.
        w_s = pwms + w_rc                                            # (G, 4, K)
        w_s = jnp.transpose(w_s, (0, 2, 1)).reshape(G, 4 * K)        # flat idx k*4+c
        w_s = jnp.pad(w_s, ((0, Gp - G), (0, 0)))                    # (Gp, 4K)
        w_s = jnp.transpose(w_s)                                     # (4K, Gp)
        kernel = functools.partial(_pwm_sum_kernel, K=K, T=T)
        w_spec = pl.BlockSpec((4 * K, tg), lambda i, j: (0, j))
        w_arg = w_s

    out = pl.pallas_call(
        kernel,
        out_shape=jax.ShapeDtypeStruct((Np, Gp), jnp.float32),
        grid=grid,
        in_specs=[
            pl.BlockSpec((tn, 4, L), lambda i, j: (i, 0, 0)),
            w_spec,
        ],
        out_specs=pl.BlockSpec((tn, tg), lambda i, j: (i, j)),
        compiler_params=pltpu.CompilerParams(
            dimension_semantics=("parallel", "parallel")),
    )(x_p, w_arg)

    return out[:N, :G]


def _pwm_ref(x, pwms, scoring='sum'):
    """Pure-JAX reference mirroring the PyTorch forward (for sanity check)."""
    N, _, L = x.shape
    G, _, K = pwms.shape
    T = L - K + 1
    x_rev = jnp.flip(jnp.flip(x, axis=1), axis=2)

    def conv(inp):
        out = jnp.zeros((N, G, T), jnp.float32)
        for k in range(K):
            out = out + jnp.einsum('gc,nct->ngt', pwms[:, :, k],
                                   inp[:, :, k:k + T],
                                   precision=jax.lax.Precision.HIGHEST)
        return out

    o = jnp.concatenate([conv(x), conv(x_rev)], axis=2)
    if scoring == 'max':
        return jnp.max(o, axis=2)
    return jnp.sum(o, axis=2)


def _assert_close(got, ref, name):
    # Tolerance sized so that even if the MXU executes the f32 dot as a
    # reduced-precision (bf16-pass) matmul it still passes, while any indexing /
    # strand-flip bug (errors of order the score magnitude) is caught.
    err = float(jnp.max(jnp.abs(got - ref)))
    tol = 5e-2 + 1e-2 * float(jnp.max(jnp.abs(ref)))
    assert err <= tol, f"{name}: max abs err {err} > tol {tol}"


if __name__ == "__main__":
    key = jax.random.PRNGKey(0)
    kx, kw = jax.random.split(key)

    # Small shapes consistent with the module: batch=2, 4 DNA channels,
    # input_length=16, groups (num PWMs)=4, kernel_size=8.
    N, L = 2, 16
    G, K = 4, 8

    x = jax.random.uniform(kx, (N, 4, L), dtype=jnp.float32)      # input batch
    pwms = jax.random.normal(kw, (G, 4, K), dtype=jnp.float32)    # PWM weights

    out_sum = jax.block_until_ready(pwm_forward(x, pwms, scoring='sum'))
    out_max = jax.block_until_ready(pwm_forward(x, pwms, scoring='max'))

    ref_sum = _pwm_ref(x, pwms, 'sum')
    ref_max = _pwm_ref(x, pwms, 'max')

    assert out_sum.shape == (N, G) and out_max.shape == (N, G)
    _assert_close(out_sum, ref_sum, "sum")
    _assert_close(out_max, ref_max, "max")

    print("KERNEL_OK")
</pallas_src>

<mosaic_0001>
module attributes {stable_mosaic.version = 11 : i64} {
  func.func @_pwm_sum_kernel(%arg0: i32, %arg1: i32, %arg2: memref<8x4x16xf32, #tpu.memory_space<vmem>>, %arg3: memref<32x128xf32, #tpu.memory_space<vmem>>, %arg4: memref<8x128xf32, #tpu.memory_space<vmem>>) attributes {dimension_semantics = [#tpu.dimension_semantics<parallel>, #tpu.dimension_semantics<parallel>], iteration_bounds = array<i64: 1, 1>, scalar_prefetch = 0 : i64, scratch_operands = 0 : i64, tpu.core_type = #tpu.core_type<tc>, window_params = [{transform_indices = @transform_0, window_bounds = array<i64: 8, 4, 16>}, {transform_indices = @transform_1, window_bounds = array<i64: 32, 128>}, {transform_indices = @transform_2, window_bounds = array<i64: 8, 128>}]} {
    %c0 = arith.constant 0 : index
    %c0_0 = arith.constant 0 : index
    %c0_1 = arith.constant 0 : index
    %0 = vector.load %arg2[%c0, %c0_0, %c0_1] : memref<8x4x16xf32, #tpu.memory_space<vmem>>, vector<8x4x16xf32>
    %1 = vector.extract_strided_slice %0 {offsets = [0, 0, 0], sizes = [8, 4, 9], strides = [1, 1, 1]} : vector<8x4x16xf32> to vector<8x4x9xf32>
    %cst = arith.constant dense<0.000000e+00> : vector<8x4xf32>
    %2 = vector.multi_reduction <add>, %1, %cst [2] : vector<8x4x9xf32> to vector<8x4xf32>
    %3 = vector.extract_strided_slice %0 {offsets = [0, 0, 1], sizes = [8, 4, 9], strides = [1, 1, 1]} : vector<8x4x16xf32> to vector<8x4x9xf32>
    %cst_2 = arith.constant dense<0.000000e+00> : vector<8x4xf32>
    %4 = vector.multi_reduction <add>, %3, %cst_2 [2] : vector<8x4x9xf32> to vector<8x4xf32>
    %5 = vector.extract_strided_slice %0 {offsets = [0, 0, 2], sizes = [8, 4, 9], strides = [1, 1, 1]} : vector<8x4x16xf32> to vector<8x4x9xf32>
    %cst_3 = arith.constant dense<0.000000e+00> : vector<8x4xf32>
    %6 = vector.multi_reduction <add>, %5, %cst_3 [2] : vector<8x4x9xf32> to vector<8x4xf32>
    %7 = vector.extract_strided_slice %0 {offsets = [0, 0, 3], sizes = [8, 4, 9], strides = [1, 1, 1]} : vector<8x4x16xf32> to vector<8x4x9xf32>
    %cst_4 = arith.constant dense<0.000000e+00> : vector<8x4xf32>
    %8 = vector.multi_reduction <add>, %7, %cst_4 [2] : vector<8x4x9xf32> to vector<8x4xf32>
    %9 = vector.extract_strided_slice %0 {offsets = [0, 0, 4], sizes = [8, 4, 9], strides = [1, 1, 1]} : vector<8x4x16xf32> to vector<8x4x9xf32>
    %cst_5 = arith.constant dense<0.000000e+00> : vector<8x4xf32>
    %10 = vector.multi_reduction <add>, %9, %cst_5 [2] : vector<8x4x9xf32> to vector<8x4xf32>
    %11 = vector.extract_strided_slice %0 {offsets = [0, 0, 5], sizes = [8, 4, 9], strides = [1, 1, 1]} : vector<8x4x16xf32> to vector<8x4x9xf32>
    %cst_6 = arith.constant dense<0.000000e+00> : vector<8x4xf32>
    %12 = vector.multi_reduction <add>, %11, %cst_6 [2] : vector<8x4x9xf32> to vector<8x4xf32>
    %13 = vector.extract_strided_slice %0 {offsets = [0, 0, 6], sizes = [8, 4, 9], strides = [1, 1, 1]} : vector<8x4x16xf32> to vector<8x4x9xf32>
    %cst_7 = arith.constant dense<0.000000e+00> : vector<8x4xf32>
    %14 = vector.multi_reduction <add>, %13, %cst_7 [2] : vector<8x4x9xf32> to vector<8x4xf32>
    %15 = vector.extract_strided_slice %0 {offsets = [0, 0, 7], sizes = [8, 4, 9], strides = [1, 1, 1]} : vector<8x4x16xf32> to vector<8x4x9xf32>
    %cst_8 = arith.constant dense<0.000000e+00> : vector<8x4xf32>
    %16 = vector.multi_reduction <add>, %15, %cst_8 [2] : vector<8x4x9xf32> to vector<8x4xf32>
    %17 = tpu.concatenate %2, %4, %6, %8, %10, %12, %14, %16 in 1 : vector<8x4xf32>, vector<8x4xf32>, vector<8x4xf32>, vector<8x4xf32>, vector<8x4xf32>, vector<8x4xf32>, vector<8x4xf32>, vector<8x4xf32> -> vector<8x32xf32>
    %c0_9 = arith.constant 0 : index
    %c0_10 = arith.constant 0 : index
    %18 = vector.load %arg3[%c0_9, %c0_10] : memref<32x128xf32, #tpu.memory_space<vmem>>, vector<32x128xf32>
    %cst_11 = arith.constant dense<0.000000e+00> : vector<8x128xf32>
    %19 = tpu.matmul %17, %18, %cst_11 {dimension_numbers = #tpu.dot_dimension_numbers<[1], [0], [0], [1], [0, 0, 1, 1], [], []>} : vector<8x32xf32>, vector<32x128xf32>, vector<8x128xf32> -> vector<8x128xf32>
    %c0_12 = arith.constant 0 : index
    %c0_13 = arith.constant 0 : index
    %20 = vector.load %arg4[%c0_12, %c0_13] : memref<8x128xf32, #tpu.memory_space<vmem>>, vector<8x128xf32>
    tpu.vector_store %arg4[%c0_12, %c0_13], %19 {strides = array<i32>} : memref<8x128xf32, #tpu.memory_space<vmem>>, vector<8x128xf32>,
    return
  }
  func.func @transform_0(%arg0: i32, %arg1: i32) -> (i32, i32, i32) {
    %c0_i32 = arith.constant 0 : i32
    %c0_i32_0 = arith.constant 0 : i32
    %c0_i32_1 = arith.constant 0 : i32
    return %arg0, %c0_i32, %c0_i32_0 : i32, i32, i32
  }
  func.func @transform_1(%arg0: i32, %arg1: i32) -> (i32, i32) {
    %c0_i32 = arith.constant 0 : i32
    %c0_i32_0 = arith.constant 0 : i32
    return %c0_i32, %arg1 : i32, i32
  }
  func.func @transform_2(%arg0: i32, %arg1: i32) -> (i32, i32) {
    %c0_i32 = arith.constant 0 : i32
    return %arg0, %arg1 : i32, i32
  }
}

</mosaic_0001>

<llo_original>
// kernel: tpu_custom_call.1
$region0: #{tpu_custom_call.1}
  #allocation0 [shape = 'u32[]', space=smem, size = 0x4, offset = 0x4, fixed_abs, tag = 'smem constant byte address 0x4 - core index']
  #allocation1 [shape = 'u32[144,128]{1,0:T(1,128)}', space=vmem, size = 0x12000, scoped, tag = 'internal scratch']
  %s0 = inlined_call_operand.hbm [shape: f32[8,4,16], index: 0, kind: input, shape index: {}]
  %s1 = inlined_call_operand.hbm [shape: f32[32,128], index: 1, kind: input, shape index: {}]
  %s2 = inlined_call_operand.hbm [shape: f32[8,128], index: 2, kind: output, shape index: {}]
  %s3 = sld [smem:[#allocation0]]
  $region26: #{tpu_custom_call.1} parent=0
    _
  %s5 = ssub.s32 1, %s3
  %s6 = scalar_select 0, %s5, %s3
  $region1: #{tpu_custom_call.1} parent=0
    #allocation2 [shape = 'u8[16384]{0}', space=vmem, size = 0x4000, scoped, tag = 'input window, operand 0, single buffered']
    #allocation3 [shape = 's32[1]{0}', space=sflag, size = 0x4, scoped, tag = 'scoped memory for tpu_custom_call.1']
    #allocation4 [shape = 's32[1]{0}', space=sflag, size = 0x4, scoped, tag = 'scoped memory for tpu_custom_call.1']
    #allocation5 [shape = 'u8[16384]{0}', space=vmem, size = 0x4000, scoped, tag = 'input window, operand 1, single buffered']
    #allocation6 [shape = 's32[1]{0}', space=sflag, size = 0x4, scoped, tag = 'scoped memory for tpu_custom_call.1']
    #allocation7 [shape = 'u8[4096]{0}', space=vmem, size = 0x1000, scoped, tag = 'output window, operand 0, single buffered']
    %7 = vsyncpa [#allocation3], 0
    %8 = vsyncpa [#allocation6], 0
    %9 = vsyncpa [#allocation4], 0
    // Predicated region
    $region2: #{tpu_custom_call.1} parent=1 // pred_check
      _
    $region3: #{tpu_custom_call.1} parent=1 // pred_check_branch
      %11 = sbr.rel (0) target = $region5
    $region4: #{tpu_custom_call.1} parent=1 // pred_region
      %s13 = ssub.s32 512, 512
      %14 = vsyncadd [#allocation3], %s13
      %s15 = sshll.u32 [#allocation2], 4
      %s16 = int_to_ptr.vmem [resolvable:$true] %s15
      %21 = dma.hbm_to_vmem [thread:$0]  %s0, 512, %s16, [#allocation3], 64, 64, 4
    $region5: #{tpu_custom_call.1} parent=1 // pred_fallthru
      _
    // Predicated region
    $region6: #{tpu_custom_call.1} parent=1 // pred_check
      _
    $region7: #{tpu_custom_call.1} parent=1 // pred_check_branch
      %23 = sbr.rel (0) target = $region9
    $region8: #{tpu_custom_call.1} parent=1 // pred_region
      %s25 = ssub.s32 512, 512
      %26 = vsyncadd [#allocation6], %s25
      %s27 = sshll.u32 [#allocation5], 4
      %s28 = int_to_ptr.vmem [resolvable:$true] %s27
      %33 = dma.hbm_to_vmem [thread:$0]  %s1, 512, %s28, [#allocation6], 128, 128, 8
    $region9: #{tpu_custom_call.1} parent=1 // pred_fallthru
      _
    // Predicated region
    $region10: #{tpu_custom_call.1} parent=1 // pred_check
      _
    $region11: #{tpu_custom_call.1} parent=1 // pred_check_branch
      %35 = sbr.rel (0) target = $region13
    $region12: #{tpu_custom_call.1} parent=1 // pred_region
      %36 = dma.done [#allocation3], 512
    $region13: #{tpu_custom_call.1} parent=1 // pred_fallthru
      _
    // Predicated region
    $region14: #{tpu_custom_call.1} parent=1 // pred_check
      _
    $region15: #{tpu_custom_call.1} parent=1 // pred_check_branch
      %38 = sbr.rel (0) target = $region17
    $region16: #{tpu_custom_call.1} parent=1 // pred_region
      %39 = dma.done [#allocation6], 512
    $region17: #{tpu_custom_call.1} parent=1 // pred_fallthru
      _
    %v40 = vld [vmem:[#allocation2] sm:$0xf]
    %v41 = vld [vmem:[#allocation2 + $0x4] sm:$0xf]
    %v42 = vld [vmem:[#allocation2 + $0x8] sm:$0xf]
    %v43 = vld [vmem:[#allocation2 + $0xc] sm:$0xf]
    %v44 = vld [vmem:[#allocation2 + $0x10] sm:$0xf]
    %v45 = vld [vmem:[#allocation2 + $0x14] sm:$0xf]
    %v46 = vld [vmem:[#allocation2 + $0x18] sm:$0xf]
    %v47 = vld [vmem:[#allocation2 + $0x1c] sm:$0xf]
    %vm48 = vcmask 68608
    %v49 = vsel %vm48, %v40, 0.0
    %50 = vadd.xlane.f32.xlu0 %v49
    %v51 = vpop.xlane.xlu0 %50
    %v52 = vsel %vm48, %v41, 0.0
    %53 = vadd.xlane.f32.xlu0 %v52
    %v54 = vpop.xlane.xlu0 %53
    %v55 = vsel %vm48, %v42, 0.0
    %56 = vadd.xlane.f32.xlu0 %v55
    %v57 = vpop.xlane.xlu0 %56
    %v58 = vsel %vm48, %v43, 0.0
    %59 = vadd.xlane.f32.xlu0 %v58
    %v60 = vpop.xlane.xlu0 %59
    %v61 = vsel %vm48, %v44, 0.0
    %62 = vadd.xlane.f32.xlu0 %v61
    %v63 = vpop.xlane.xlu0 %62
    %v64 = vsel %vm48, %v45, 0.0
    %65 = vadd.xlane.f32.xlu0 %v64
    %v66 = vpop.xlane.xlu0 %65
    %v67 = vsel %vm48, %v46, 0.0
    %68 = vadd.xlane.f32.xlu0 %v67
    %v69 = vpop.xlane.xlu0 %68
    %v70 = vsel %vm48, %v47, 0.0
    %71 = vadd.xlane.f32.xlu0 %v70
    %v72 = vpop.xlane.xlu0 %71
    %81 = vrot.lane.b32.xlu0 %v40, 127
    %v82 = vpop.permute.xlu0 %81
    %83 = vrot.lane.b32.xlu0 %v41, 127
    %v84 = vpop.permute.xlu0 %83
    %85 = vrot.lane.b32.xlu0 %v42, 127
    %v86 = vpop.permute.xlu0 %85
    %87 = vrot.lane.b32.xlu0 %v43, 127
    %v88 = vpop.permute.xlu0 %87
    %89 = vrot.lane.b32.xlu0 %v44, 127
    %v90 = vpop.permute.xlu0 %89
    %91 = vrot.lane.b32.xlu0 %v45, 127
    %v92 = vpop.permute.xlu0 %91
    %93 = vrot.lane.b32.xlu0 %v46, 127
    %v94 = vpop.permute.xlu0 %93
    %95 = vrot.lane.b32.xlu0 %v47, 127
    %v96 = vpop.permute.xlu0 %95
    %v105 = vsel %vm48, %v82, 0.0
    %106 = vadd.xlane.f32.xlu0 %v105
    %v107 = vpop.xlane.xlu0 %106
    %v108 = vsel %vm48, %v84, 0.0
    %109 = vadd.xlane.f32.xlu0 %v108
    %v110 = vpop.xlane.xlu0 %109
    %v111 = vsel %vm48, %v86, 0.0
    %112 = vadd.xlane.f32.xlu0 %v111
    %v113 = vpop.xlane.xlu0 %112
    %v114 = vsel %vm48, %v88, 0.0
    %115 = vadd.xlane.f32.xlu0 %v114
    %v116 = vpop.xlane.xlu0 %115
    %v117 = vsel %vm48, %v90, 0.0
    %118 = vadd.xlane.f32.xlu0 %v117
    %v119 = vpop.xlane.xlu0 %118
    %v120 = vsel %vm48, %v92, 0.0
    %121 = vadd.xlane.f32.xlu0 %v120
    %v122 = vpop.xlane.xlu0 %121
    %v123 = vsel %vm48, %v94, 0.0
    %124 = vadd.xlane.f32.xlu0 %v123
    %v125 = vpop.xlane.xlu0 %124
    %v126 = vsel %vm48, %v96, 0.0
    %127 = vadd.xlane.f32.xlu0 %v126
    %v128 = vpop.xlane.xlu0 %127
    %129 = vrot.lane.b32.xlu0 %v40, 126
    %v130 = vpop.permute.xlu0 %129
    %131 = vrot.lane.b32.xlu0 %v41, 126
    %v132 = vpop.permute.xlu0 %131
    %133 = vrot.lane.b32.xlu0 %v42, 126
    %v134 = vpop.permute.xlu0 %133
    %135 = vrot.lane.b32.xlu0 %v43, 126
    %v136 = vpop.permute.xlu0 %135
    %137 = vrot.lane.b32.xlu0 %v44, 126
    %v138 = vpop.permute.xlu0 %137
    %139 = vrot.lane.b32.xlu0 %v45, 126
    %v140 = vpop.permute.xlu0 %139
    %141 = vrot.lane.b32.xlu0 %v46, 126
    %v142 = vpop.permute.xlu0 %141
    %143 = vrot.lane.b32.xlu0 %v47, 126
    %v144 = vpop.permute.xlu0 %143
    %v153 = vsel %vm48, %v130, 0.0
    %154 = vadd.xlane.f32.xlu0 %v153
    %v155 = vpop.xlane.xlu0 %154
    %v156 = vsel %vm48, %v132, 0.0
    %157 = vadd.xlane.f32.xlu0 %v156
    %v158 = vpop.xlane.xlu0 %157
    %v159 = vsel %vm48, %v134, 0.0
    %160 = vadd.xlane.f32.xlu0 %v159
    %v161 = vpop.xlane.xlu0 %160
    %v162 = vsel %vm48, %v136, 0.0
    %163 = vadd.xlane.f32.xlu0 %v162
    %v164 = vpop.xlane.xlu0 %163
    %v165 = vsel %vm48, %v138, 0.0
    %166 = vadd.xlane.f32.xlu0 %v165
    %v167 = vpop.xlane.xlu0 %166
    %v168 = vsel %vm48, %v140, 0.0
    %169 = vadd.xlane.f32.xlu0 %v168
    %v170 = vpop.xlane.xlu0 %169
    %v171 = vsel %vm48, %v142, 0.0
    %172 = vadd.xlane.f32.xlu0 %v171
    %v173 = vpop.xlane.xlu0 %172
    %v174 = vsel %vm48, %v144, 0.0
    %175 = vadd.xlane.f32.xlu0 %v174
    %v176 = vpop.xlane.xlu0 %175
    %177 = vrot.lane.b32.xlu0 %v40, 125
    %v178 = vpop.permute.xlu0 %177
    %179 = vrot.lane.b32.xlu0 %v41, 125
    %v180 = vpop.permute.xlu0 %179
    %181 = vrot.lane.b32.xlu0 %v42, 125
    %v182 = vpop.permute.xlu0 %181
    %183 = vrot.lane.b32.xlu0 %v43, 125
    %v184 = vpop.permute.xlu0 %183
    %185 = vrot.lane.b32.xlu0 %v44, 125
    %v186 = vpop.permute.xlu0 %185
    %187 = vrot.lane.b32.xlu0 %v45, 125
    %v188 = vpop.permute.xlu0 %187
    %189 = vrot.lane.b32.xlu0 %v46, 125
    %v190 = vpop.permute.xlu0 %189
    %191 = vrot.lane.b32.xlu0 %v47, 125
    %v192 = vpop.permute.xlu0 %191
    %v201 = vsel %vm48, %v178, 0.0
    %202 = vadd.xlane.f32.xlu0 %v201
    %v203 = vpop.xlane.xlu0 %202
    %v204 = vsel %vm48, %v180, 0.0
    %205 = vadd.xlane.f32.xlu0 %v204
    %v206 = vpop.xlane.xlu0 %205
    %v207 = vsel %vm48, %v182, 0.0
    %208 = vadd.xlane.f32.xlu0 %v207
    %v209 = vpop.xlane.xlu0 %208
    %v210 = vsel %vm48, %v184, 0.0
    %211 = vadd.xlane.f32.xlu0 %v210
    %v212 = vpop.xlane.xlu0 %211
    %v213 = vsel %vm48, %v186, 0.0
    %214 = vadd.xlane.f32.xlu0 %v213
    %v215 = vpop.xlane.xlu0 %214
    %v216 = vsel %vm48, %v188, 0.0
    %217 = vadd.xlane.f32.xlu0 %v216
    %v218 = vpop.xlane.xlu0 %217
    %v219 = vsel %vm48, %v190, 0.0
    %220 = vadd.xlane.f32.xlu0 %v219
    %v221 = vpop.xlane.xlu0 %220
    %v222 = vsel %vm48, %v192, 0.0
    %223 = vadd.xlane.f32.xlu0 %v222
    %v224 = vpop.xlane.xlu0 %223
    %225 = vrot.lane.b32.xlu0 %v40, 124
    %v226 = vpop.permute.xlu0 %225
    %227 = vrot.lane.b32.xlu0 %v41, 124
    %v228 = vpop.permute.xlu0 %227
    %229 = vrot.lane.b32.xlu0 %v42, 124
    %v230 = vpop.permute.xlu0 %229
    %231 = vrot.lane.b32.xlu0 %v43, 124
    %v232 = vpop.permute.xlu0 %231
    %233 = vrot.lane.b32.xlu0 %v44, 124
    %v234 = vpop.permute.xlu0 %233
    %235 = vrot.lane.b32.xlu0 %v45, 124
    %v236 = vpop.permute.xlu0 %235
    %237 = vrot.lane.b32.xlu0 %v46, 124
    %v238 = vpop.permute.xlu0 %237
    %239 = vrot.lane.b32.xlu0 %v47, 124
    %v240 = vpop.permute.xlu0 %239
    %v249 = vsel %vm48, %v226, 0.0
    %250 = vadd.xlane.f32.xlu0 %v249
    %v251 = vpop.xlane.xlu0 %250
    %v252 = vsel %vm48, %v228, 0.0
    %253 = vadd.xlane.f32.xlu0 %v252
    %v254 = vpop.xlane.xlu0 %253
    %v255 = vsel %vm48, %v230, 0.0
    %256 = vadd.xlane.f32.xlu0 %v255
    %v257 = vpop.xlane.xlu0 %256
    %v258 = vsel %vm48, %v232, 0.0
    %259 = vadd.xlane.f32.xlu0 %v258
    %v260 = vpop.xlane.xlu0 %259
    %v261 = vsel %vm48, %v234, 0.0
    %262 = vadd.xlane.f32.xlu0 %v261
    %v263 = vpop.xlane.xlu0 %262
    %v264 = vsel %vm48, %v236, 0.0
    %265 = vadd.xlane.f32.xlu0 %v264
    %v266 = vpop.xlane.xlu0 %265
    %v267 = vsel %vm48, %v238, 0.0
    %268 = vadd.xlane.f32.xlu0 %v267
    %v269 = vpop.xlane.xlu0 %268
    %v270 = vsel %vm48, %v240, 0.0
    %271 = vadd.xlane.f32.xlu0 %v270
    %v272 = vpop.xlane.xlu0 %271
    %273 = vrot.lane.b32.xlu0 %v40, 123
    %v274 = vpop.permute.xlu0 %273
    %275 = vrot.lane.b32.xlu0 %v41, 123
    %v276 = vpop.permute.xlu0 %275
    %277 = vrot.lane.b32.xlu0 %v42, 123
    %v278 = vpop.permute.xlu0 %277
    %279 = vrot.lane.b32.xlu0 %v43, 123
    %v280 = vpop.permute.xlu0 %279
    %281 = vrot.lane.b32.xlu0 %v44, 123
    %v282 = vpop.permute.xlu0 %281
    %283 = vrot.lane.b32.xlu0 %v45, 123
    %v284 = vpop.permute.xlu0 %283
    %285 = vrot.lane.b32.xlu0 %v46, 123
    %v286 = vpop.permute.xlu0 %285
    %287 = vrot.lane.b32.xlu0 %v47, 123
    %v288 = vpop.permute.xlu0 %287
    %v297 = vsel %vm48, %v274, 0.0
    %298 = vadd.xlane.f32.xlu0 %v297
    %v299 = vpop.xlane.xlu0 %298
    %v300 = vsel %vm48, %v276, 0.0
    %301 = vadd.xlane.f32.xlu0 %v300
    %v302 = vpop.xlane.xlu0 %301
    %v303 = vsel %vm48, %v278, 0.0
    %304 = vadd.xlane.f32.xlu0 %v303
    %v305 = vpop.xlane.xlu0 %304
    %v306 = vsel %vm48, %v280, 0.0
    %307 = vadd.xlane.f32.xlu0 %v306
    %v308 = vpop.xlane.xlu0 %307
    %v309 = vsel %vm48, %v282, 0.0
    %310 = vadd.xlane.f32.xlu0 %v309
    %v311 = vpop.xlane.xlu0 %310
    %v312 = vsel %vm48, %v284, 0.0
    %313 = vadd.xlane.f32.xlu0 %v312
    %v314 = vpop.xlane.xlu0 %313
    %v315 = vsel %vm48, %v286, 0.0
    %316 = vadd.xlane.f32.xlu0 %v315
    %v317 = vpop.xlane.xlu0 %316
    %v318 = vsel %vm48, %v288, 0.0
    %319 = vadd.xlane.f32.xlu0 %v318
    %v320 = vpop.xlane.xlu0 %319
    %321 = vrot.lane.b32.xlu0 %v40, 122
    %v322 = vpop.permute.xlu0 %321
    %323 = vrot.lane.b32.xlu0 %v41, 122
    %v324 = vpop.permute.xlu0 %323
    %325 = vrot.lane.b32.xlu0 %v42, 122
    %v326 = vpop.permute.xlu0 %325
    %327 = vrot.lane.b32.xlu0 %v43, 122
    %v328 = vpop.permute.xlu0 %327
    %329 = vrot.lane.b32.xlu0 %v44, 122
    %v330 = vpop.permute.xlu0 %329
    %331 = vrot.lane.b32.xlu0 %v45, 122
    %v332 = vpop.permute.xlu0 %331
    %333 = vrot.lane.b32.xlu0 %v46, 122
    %v334 = vpop.permute.xlu0 %333
    %335 = vrot.lane.b32.xlu0 %v47, 122
    %v336 = vpop.permute.xlu0 %335
    %v345 = vsel %vm48, %v322, 0.0
    %346 = vadd.xlane.f32.xlu0 %v345
    %v347 = vpop.xlane.xlu0 %346
    %v348 = vsel %vm48, %v324, 0.0
    %349 = vadd.xlane.f32.xlu0 %v348
    %v350 = vpop.xlane.xlu0 %349
    %v351 = vsel %vm48, %v326, 0.0
    %352 = vadd.xlane.f32.xlu0 %v351
    %v353 = vpop.xlane.xlu0 %352
    %v354 = vsel %vm48, %v328, 0.0
    %355 = vadd.xlane.f32.xlu0 %v354
    %v356 = vpop.xlane.xlu0 %355
    %v357 = vsel %vm48, %v330, 0.0
    %358 = vadd.xlane.f32.xlu0 %v357
    %v359 = vpop.xlane.xlu0 %358
    %v360 = vsel %vm48, %v332, 0.0
    %361 = vadd.xlane.f32.xlu0 %v360
    %v362 = vpop.xlane.xlu0 %361
    %v363 = vsel %vm48, %v334, 0.0
    %364 = vadd.xlane.f32.xlu0 %v363
    %v365 = vpop.xlane.xlu0 %364
    %v366 = vsel %vm48, %v336, 0.0
    %367 = vadd.xlane.f32.xlu0 %v366
    %v368 = vpop.xlane.xlu0 %367
    %369 = vrot.lane.b32.xlu0 %v40, 121
    %v370 = vpop.permute.xlu0 %369
    %371 = vrot.lane.b32.xlu0 %v41, 121
    %v372 = vpop.permute.xlu0 %371
    %373 = vrot.lane.b32.xlu0 %v42, 121
    %v374 = vpop.permute.xlu0 %373
    %375 = vrot.lane.b32.xlu0 %v43, 121
    %v376 = vpop.permute.xlu0 %375
    %377 = vrot.lane.b32.xlu0 %v44, 121
    %v378 = vpop.permute.xlu0 %377
    %379 = vrot.lane.b32.xlu0 %v45, 121
    %v380 = vpop.permute.xlu0 %379
    %381 = vrot.lane.b32.xlu0 %v46, 121
    %v382 = vpop.permute.xlu0 %381
    %383 = vrot.lane.b32.xlu0 %v47, 121
    %v384 = vpop.permute.xlu0 %383
    %v393 = vsel %vm48, %v370, 0.0
    %394 = vadd.xlane.f32.xlu0 %v393
    %v395 = vpop.xlane.xlu0 %394
    %v396 = vsel %vm48, %v372, 0.0
    %397 = vadd.xlane.f32.xlu0 %v396
    %v398 = vpop.xlane.xlu0 %397
    %v399 = vsel %vm48, %v374, 0.0
    %400 = vadd.xlane.f32.xlu0 %v399
    %v401 = vpop.xlane.xlu0 %400
    %v402 = vsel %vm48, %v376, 0.0
    %403 = vadd.xlane.f32.xlu0 %v402
    %v404 = vpop.xlane.xlu0 %403
    %v405 = vsel %vm48, %v378, 0.0
    %406 = vadd.xlane.f32.xlu0 %v405
    %v407 = vpop.xlane.xlu0 %406
    %v408 = vsel %vm48, %v380, 0.0
    %409 = vadd.xlane.f32.xlu0 %v408
    %v410 = vpop.xlane.xlu0 %409
    %v411 = vsel %vm48, %v382, 0.0
    %412 = vadd.xlane.f32.xlu0 %v411
    %v413 = vpop.xlane.xlu0 %412
    %v414 = vsel %vm48, %v384, 0.0
    %415 = vadd.xlane.f32.xlu0 %v414
    %v416 = vpop.xlane.xlu0 %415
    %v425 = vlaneseq
    %v426 = vand.u32 %v425, 127
    %v427 = vlaneseq
    %v428 = vshrl.u32 %v427, 7
    %v429 = vsub.s32 %v426, %v428
    %v430 = vrot.slane %v51, %v429
    %v431 = vlaneseq
    %v432 = vshrl.u32 %v431, 7
    %v433 = vsub.s32 %v426, %v432
    %v434 = vrot.slane %v54, %v433
    %v435 = vlaneseq
    %v436 = vshrl.u32 %v435, 7
    %v437 = vsub.s32 %v426, %v436
    %v438 = vrot.slane %v57, %v437
    %v439 = vlaneseq
    %v440 = vshrl.u32 %v439, 7
    %v441 = vsub.s32 %v426, %v440
    %v442 = vrot.slane %v60, %v441
    %v443 = vlaneseq
    %v444 = vshrl.u32 %v443, 7
    %v445 = vsub.s32 %v426, %v444
    %v446 = vrot.slane %v63, %v445
    %v447 = vlaneseq
    %v448 = vshrl.u32 %v447, 7
    %v449 = vsub.s32 %v426, %v448
    %v450 = vrot.slane %v66, %v449
    %v451 = vlaneseq
    %v452 = vshrl.u32 %v451, 7
    %v453 = vsub.s32 %v426, %v452
    %v454 = vrot.slane %v69, %v453
    %v455 = vlaneseq
    %v456 = vshrl.u32 %v455, 7
    %v457 = vsub.s32 %v426, %v456
    %v458 = vrot.slane %v72, %v457
    %vm459 = vcmask 1041409
    %v460 = vsel %vm459, %v434, %v430
    %vm461 = vcmask 1042434
    %v462 = vsel %vm461, %v438, %v460
    %vm463 = vcmask 1043459
    %v464 = vsel %vm463, %v442, %v462
    %vm465 = vcmask 1044484
    %v466 = vsel %vm465, %v446, %v464
    %vm467 = vcmask 1045509
    %v468 = vsel %vm467, %v450, %v466
    %vm469 = vcmask 1046534
    %v470 = vsel %vm469, %v454, %v468
    %vm471 = vcmask 1047559
    %v472 = vsel %vm471, %v458, %v470
    %v482 = vadd.s32 %v426, 4294967292
    %v483 = vlaneseq
    %v484 = vshrl.u32 %v483, 7
    %v485 = vsub.s32 %v482, %v484
    %v486 = vrot.slane %v107, %v485
    %v487 = vlaneseq
    %v488 = vshrl.u32 %v487, 7
    %v489 = vsub.s32 %v482, %v488
    %v490 = vrot.slane %v110, %v489
    %v491 = vlaneseq
    %v492 = vshrl.u32 %v491, 7
    %v493 = vsub.s32 %v482, %v492
    %v494 = vrot.slane %v113, %v493
    %v495 = vlaneseq
    %v496 = vshrl.u32 %v495, 7
    %v497 = vsub.s32 %v482, %v496
    %v498 = vrot.slane %v116, %v497
    %v499 = vlaneseq
    %v500 = vshrl.u32 %v499, 7
    %v501 = vsub.s32 %v482, %v500
    %v502 = vrot.slane %v119, %v501
    %v503 = vlaneseq
    %v504 = vshrl.u32 %v503, 7
    %v505 = vsub.s32 %v482, %v504
    %v506 = vrot.slane %v122, %v505
    %v507 = vlaneseq
    %v508 = vshrl.u32 %v507, 7
    %v509 = vsub.s32 %v482, %v508
    %v510 = vrot.slane %v125, %v509
    %v511 = vlaneseq
    %v512 = vshrl.u32 %v511, 7
    %v513 = vsub.s32 %v482, %v512
    %v514 = vrot.slane %v128, %v513
    %v515 = vsel %vm459, %v490, %v486
    %v516 = vsel %vm461, %v494, %v515
    %v517 = vsel %vm463, %v498, %v516
    %v518 = vsel %vm465, %v502, %v517
    %v519 = vsel %vm467, %v506, %v518
    %v520 = vsel %vm469, %v510, %v519
    %v521 = vsel %vm471, %v514, %v520
    %v531 = vadd.s32 %v426, 4294967288
    %v532 = vlaneseq
    %v533 = vshrl.u32 %v532, 7
    %v534 = vsub.s32 %v531, %v533
    %v535 = vrot.slane %v155, %v534
    %v536 = vlaneseq
    %v537 = vshrl.u32 %v536, 7
    %v538 = vsub.s32 %v531, %v537
    %v539 = vrot.slane %v158, %v538
    %v540 = vlaneseq
    %v541 = vshrl.u32 %v540, 7
    %v542 = vsub.s32 %v531, %v541
    %v543 = vrot.slane %v161, %v542
    %v544 = vlaneseq
    %v545 = vshrl.u32 %v544, 7
    %v546 = vsub.s32 %v531, %v545
    %v547 = vrot.slane %v164, %v546
    %v548 = vlaneseq
    %v549 = vshrl.u32 %v548, 7
    %v550 = vsub.s32 %v531, %v549
    %v551 = vrot.slane %v167, %v550
    %v552 = vlaneseq
    %v553 = vshrl.u32 %v552, 7
    %v554 = vsub.s32 %v531, %v553
    %v555 = vrot.slane %v170, %v554
    %v556 = vlaneseq
    %v557 = vshrl.u32 %v556, 7
    %v558 = vsub.s32 %v531, %v557
    %v559 = vrot.slane %v173, %v558
    %v560 = vlaneseq
    %v561 = vshrl.u32 %v560, 7
    %v562 = vsub.s32 %v531, %v561
    %v563 = vrot.slane %v176, %v562
    %v564 = vsel %vm459, %v539, %v535
    %v565 = vsel %vm461, %v543, %v564
    %v566 = vsel %vm463, %v547, %v565
    %v567 = vsel %vm465, %v551, %v566
    %v568 = vsel %vm467, %v555, %v567
    %v569 = vsel %vm469, %v559, %v568
    %v570 = vsel %vm471, %v563, %v569
    %v580 = vadd.s32 %v426, 4294967284
    %v581 = vlaneseq
    %v582 = vshrl.u32 %v581, 7
    %v583 = vsub.s32 %v580, %v582
    %v584 = vrot.slane %v203, %v583
    %v585 = vlaneseq
    %v586 = vshrl.u32 %v585, 7
    %v587 = vsub.s32 %v580, %v586
    %v588 = vrot.slane %v206, %v587
    %v589 = vlaneseq
    %v590 = vshrl.u32 %v589, 7
    %v591 = vsub.s32 %v580, %v590
    %v592 = vrot.slane %v209, %v591
    %v593 = vlaneseq
    %v594 = vshrl.u32 %v593, 7
    %v595 = vsub.s32 %v580, %v594
    %v596 = vrot.slane %v212, %v595
    %v597 = vlaneseq
    %v598 = vshrl.u32 %v597, 7
    %v599 = vsub.s32 %v580, %v598
    %v600 = vrot.slane %v215, %v599
    %v601 = vlaneseq
    %v602 = vshrl.u32 %v601, 7
    %v603 = vsub.s32 %v580, %v602
    %v604 = vrot.slane %v218, %v603
    %v605 = vlaneseq
    %v606 = vshrl.u32 %v605, 7
    %v607 = vsub.s32 %v580, %v606
    %v608 = vrot.slane %v221, %v607
    %v609 = vlaneseq
    %v610 = vshrl.u32 %v609, 7
    %v611 = vsub.s32 %v580, %v610
    %v612 = vrot.slane %v224, %v611
    %v613 = vsel %vm459, %v588, %v584
    %v614 = vsel %vm461, %v592, %v613
    %v615 = vsel %vm463, %v596, %v614
    %v616 = vsel %vm465, %v600, %v615
    %v617 = vsel %vm467, %v604, %v616
    %v618 = vsel %vm469, %v608, %v617
    %v619 = vsel %vm471, %v612, %v618
    %v629 = vadd.s32 %v426, 4294967280
    %v630 = vlaneseq
    %v631 = vshrl.u32 %v630, 7
    %v632 = vsub.s32 %v629, %v631
    %v633 = vrot.slane %v251, %v632
    %v634 = vlaneseq
    %v635 = vshrl.u32 %v634, 7
    %v636 = vsub.s32 %v629, %v635
    %v637 = vrot.slane %v254, %v636
    %v638 = vlaneseq
    %v639 = vshrl.u32 %v638, 7
    %v640 = vsub.s32 %v629, %v639
    %v641 = vrot.slane %v257, %v640
    %v642 = vlaneseq
    %v643 = vshrl.u32 %v642, 7
    %v644 = vsub.s32 %v629, %v643
    %v645 = vrot.slane %v260, %v644
    %v646 = vlaneseq
    %v647 = vshrl.u32 %v646, 7
    %v648 = vsub.s32 %v629, %v647
    %v649 = vrot.slane %v263, %v648
    %v650 = vlaneseq
    %v651 = vshrl.u32 %v650, 7
    %v652 = vsub.s32 %v629, %v651
    %v653 = vrot.slane %v266, %v652
    %v654 = vlaneseq
    %v655 = vshrl.u32 %v654, 7
    %v656 = vsub.s32 %v629, %v655
    %v657 = vrot.slane %v269, %v656
    %v658 = vlaneseq
    %v659 = vshrl.u32 %v658, 7
    %v660 = vsub.s32 %v629, %v659
    %v661 = vrot.slane %v272, %v660
    %v662 = vsel %vm459, %v637, %v633
    %v663 = vsel %vm461, %v641, %v662
    %v664 = vsel %vm463, %v645, %v663
    %v665 = vsel %vm465, %v649, %v664
    %v666 = vsel %vm467, %v653, %v665
    %v667 = vsel %vm469, %v657, %v666
    %v668 = vsel %vm471, %v661, %v667
    %v678 = vadd.s32 %v426, 4294967276
    %v679 = vlaneseq
    %v680 = vshrl.u32 %v679, 7
    %v681 = vsub.s32 %v678, %v680
    %v682 = vrot.slane %v299, %v681
    %v683 = vlaneseq
    %v684 = vshrl.u32 %v683, 7
    %v685 = vsub.s32 %v678, %v684
    %v686 = vrot.slane %v302, %v685
    %v687 = vlaneseq
    %v688 = vshrl.u32 %v687, 7
    %v689 = vsub.s32 %v678, %v688
    %v690 = vrot.slane %v305, %v689
    %v691 = vlaneseq
    %v692 = vshrl.u32 %v691, 7
    %v693 = vsub.s32 %v678, %v692
    %v694 = vrot.slane %v308, %v693
    %v695 = vlaneseq
    %v696 = vshrl.u32 %v695, 7
    %v697 = vsub.s32 %v678, %v696
    %v698 = vrot.slane %v311, %v697
    %v699 = vlaneseq
    %v700 = vshrl.u32 %v699, 7
    %v701 = vsub.s32 %v678, %v700
    %v702 = vrot.slane %v314, %v701
    %v703 = vlaneseq
    %v704 = vshrl.u32 %v703, 7
    %v705 = vsub.s32 %v678, %v704
    %v706 = vrot.slane %v317, %v705
    %v707 = vlaneseq
    %v708 = vshrl.u32 %v707, 7
    %v709 = vsub.s32 %v678, %v708
    %v710 = vrot.slane %v320, %v709
    %v711 = vsel %vm459, %v686, %v682
    %v712 = vsel %vm461, %v690, %v711
    %v713 = vsel %vm463, %v694, %v712
    %v714 = vsel %vm465, %v698, %v713
    %v715 = vsel %vm467, %v702, %v714
    %v716 = vsel %vm469, %v706, %v715
    %v717 = vsel %vm471, %v710, %v716
    %v727 = vadd.s32 %v426, 4294967272
    %v728 = vlaneseq
    %v729 = vshrl.u32 %v728, 7
    %v730 = vsub.s32 %v727, %v729
    %v731 = vrot.slane %v347, %v730
    %v732 = vlaneseq
    %v733 = vshrl.u32 %v732, 7
    %v734 = vsub.s32 %v727, %v733
    %v735 = vrot.slane %v350, %v734
    %v736 = vlaneseq
    %v737 = vshrl.u32 %v736, 7
    %v738 = vsub.s32 %v727, %v737
    %v739 = vrot.slane %v353, %v738
    %v740 = vlaneseq
    %v741 = vshrl.u32 %v740, 7
    %v742 = vsub.s32 %v727, %v741
    %v743 = vrot.slane %v356, %v742
    %v744 = vlaneseq
    %v745 = vshrl.u32 %v744, 7
    %v746 = vsub.s32 %v727, %v745
    %v747 = vrot.slane %v359, %v746
    %v748 = vlaneseq
    %v749 = vshrl.u32 %v748, 7
    %v750 = vsub.s32 %v727, %v749
    %v751 = vrot.slane %v362, %v750
    %v752 = vlaneseq
    %v753 = vshrl.u32 %v752, 7
    %v754 = vsub.s32 %v727, %v753
    %v755 = vrot.slane %v365, %v754
    %v756 = vlaneseq
    %v757 = vshrl.u32 %v756, 7
    %v758 = vsub.s32 %v727, %v757
    %v759 = vrot.slane %v368, %v758
    %v760 = vsel %vm459, %v735, %v731
    %v761 = vsel %vm461, %v739, %v760
    %v762 = vsel %vm463, %v743, %v761
    %v763 = vsel %vm465, %v747, %v762
    %v764 = vsel %vm467, %v751, %v763
    %v765 = vsel %vm469, %v755, %v764
    %v766 = vsel %vm471, %v759, %v765
    %v776 = vadd.s32 %v426, 4294967268
    %v777 = vlaneseq
    %v778 = vshrl.u32 %v777, 7
    %v779 = vsub.s32 %v776, %v778
    %v780 = vrot.slane %v395, %v779
    %v781 = vlaneseq
    %v782 = vshrl.u32 %v781, 7
    %v783 = vsub.s32 %v776, %v782
    %v784 = vrot.slane %v398, %v783
    %v785 = vlaneseq
    %v786 = vshrl.u32 %v785, 7
    %v787 = vsub.s32 %v776, %v786
    %v788 = vrot.slane %v401, %v787
    %v789 = vlaneseq
    %v790 = vshrl.u32 %v789, 7
    %v791 = vsub.s32 %v776, %v790
    %v792 = vrot.slane %v404, %v791
    %v793 = vlaneseq
    %v794 = vshrl.u32 %v793, 7
    %v795 = vsub.s32 %v776, %v794
    %v796 = vrot.slane %v407, %v795
    %v797 = vlaneseq
    %v798 = vshrl.u32 %v797, 7
    %v799 = vsub.s32 %v776, %v798
    %v800 = vrot.slane %v410, %v799
    %v801 = vlaneseq
    %v802 = vshrl.u32 %v801, 7
    %v803 = vsub.s32 %v776, %v802
    %v804 = vrot.slane %v413, %v803
    %v805 = vlaneseq
    %v806 = vshrl.u32 %v805, 7
    %v807 = vsub.s32 %v776, %v806
    %v808 = vrot.slane %v416, %v807
    %v809 = vsel %vm459, %v784, %v780
    %v810 = vsel %vm461, %v788, %v809
    %v811 = vsel %vm463, %v792, %v810
    %v812 = vsel %vm465, %v796, %v811
    %v813 = vsel %vm467, %v800, %v812
    %v814 = vsel %vm469, %v804, %v813
    %v815 = vsel %vm471, %v808, %v814
    %vm817 = vcmask 31744
    %v818 = vsel %vm817, %v472, %v521
    %vm819 = vcmask 64512
    %v820 = vsel %vm819, %v818, %v570
    %vm821 = vcmask 97280
    %v822 = vsel %vm821, %v820, %v619
    %vm823 = vcmask 130048
    %v824 = vsel %vm823, %v822, %v668
    %vm825 = vcmask 162816
    %v826 = vsel %vm825, %v824, %v717
    %vm827 = vcmask 195584
    %v828 = vsel %vm827, %v826, %v766
    %vm829 = vcmask 228352
    %v830 = vsel %vm829, %v828, %v815
    %v831 = vld [vmem:[#allocation5] sm:$0xff]
    %v832 = vld [vmem:[#allocation5 + $0x8] sm:$0xff]
    %v833 = vld [vmem:[#allocation5 + $0x10] sm:$0xff]
    %v834 = vld [vmem:[#allocation5 + $0x18] sm:$0xff]
    %vm835 = vcmask 261120
    %v837 = vsel %vm835, %v830, 0
    %839 = vmatprep.subr.mxu0 0.0
    %840 = vmatpush1.msra.mxu0 %v831
    %841 = vmatprep.subr.mxu0 0.0
    %842 = vmatpush1.msra.mxu0 %v832
    %843 = vmatprep.subr.mxu0 0.0
    %844 = vmatpush1.msra.mxu0 %v833
    %845 = vmatprep.subr.mxu0 0.0
    %846 = vmatpush1.msra.mxu0 %v834
    %847 = vmatprep.subr.mxu0 0.0
    %848 = vmatpush1.msra.mxu0 0.0
    %849 = vmatprep.subr.mxu0 0.0
    %850 = vmatpush1.msra.mxu0 0.0
    %851 = vmatprep.subr.mxu0 0.0
    %852 = vmatpush1.msra.mxu0 0.0
    %853 = vmatprep.subr.mxu0 0.0
    %854 = vmatpush1.msra.mxu0 0.0
    %855 = vmatprep.subr.mxu0 0.0
    %856 = vmatpush1.msra.mxu0 0.0
    %857 = vmatprep.subr.mxu0 0.0
    %858 = vmatpush1.msra.mxu0 0.0
    %859 = vmatprep.subr.mxu0 0.0
    %860 = vmatpush1.msra.mxu0 0.0
    %861 = vmatprep.subr.mxu0 0.0
    %862 = vmatpush1.msra.mxu0 0.0
    %863 = vmatprep.subr.mxu0 0.0
    %864 = vmatpush1.msra.mxu0 0.0
    %865 = vmatprep.subr.mxu0 0.0
    %866 = vmatpush1.msra.mxu0 0.0
    %867 = vmatprep.subr.mxu0 0.0
    %868 = vmatpush1.msra.mxu0 0.0
    %869 = vmatprep.subr.mxu0 0.0
    %870 = vmatpush1.msra.mxu0 0.0
    %871 = vmatprep.subr.mxu0 0.0
    %872 = vmatpush1.msra.mxu0 0.0
    %873 = vmatprep.subr.mxu0 0.0
    %874 = vmatpush1.msra.mxu0 0.0
    %875 = vmatprep.subr.mxu0 0.0
    %876 = vmatpush1.msra.mxu0 0.0
    %877 = vmatprep.subr.mxu0 0.0
    %878 = vmatpush1.msra.mxu0 0.0
    %879 = vmatprep.subr.mxu0 0.0
    %880 = vmatpush1.msra.mxu0 0.0
    %881 = vmatprep.subr.mxu0 0.0
    %882 = vmatpush1.msra.mxu0 0.0
    %883 = vmatprep.subr.mxu0 0.0
    %884 = vmatpush1.msra.mxu0 0.0
    %885 = vmatprep.subr.mxu0 0.0
    %886 = vmatpush1.msra.mxu0 0.0
    %887 = vmatprep.subr.mxu0 0.0
    %888 = vmatpush1.msra.mxu0 0.0
    %889 = vmatprep.subr.mxu0 0.0
    %890 = vmatpush1.msra.mxu0 0.0
    %891 = vmatprep.subr.mxu0 0.0
    %892 = vmatpush1.msra.mxu0 0.0
    %893 = vmatprep.subr.mxu0 0.0
    %894 = vmatpush1.msra.mxu0 0.0
    %895 = vmatprep.subr.mxu0 0.0
    %896 = vmatpush1.msra.mxu0 0.0
    %897 = vmatprep.subr.mxu0 0.0
    %898 = vmatpush1.msra.mxu0 0.0
    %899 = vmatprep.subr.mxu0 0.0
    %900 = vmatpush1.msra.mxu0 0.0
    %901 = vmatprep.subr.mxu0 0.0
    %902 = vmatpush1.msra.mxu0 0.0
    %903 = vmatprep.mubr.f32.mxu0 0.0
    %904 = vmatmul.mubr.f32.gmra.mrb[0].mxu0 %v837
    %v905 = vpop.f32.mrb[0].mxu0
    %v906 = vadd.f32 0.0, %v905
    %v907 = vpop.f32.mrb[0].mxu0
    %908 = vdwg.mxu0
    %909 = vst [vmem:[#allocation7] sm:$0xff] %v906
    // Predicated region
    $region18: #{tpu_custom_call.1} parent=1 // pred_check
      _
    $region19: #{tpu_custom_call.1} parent=1 // pred_check_branch
      %911 = sbr.rel (0) target = $region21
    $region20: #{tpu_custom_call.1} parent=1 // pred_region
      %s913 = ssub.s32 128, 128
      %914 = vsyncadd [#allocation4], %s913
      %s916 = sshll.u32 [#allocation7], 4
      %s917 = int_to_ptr.vmem [resolvable:$true] %s916
      %919 = dma.vmem_to_hbm [thread:$0]  %s917, 128, %s2, [#allocation4]
    $region21: #{tpu_custom_call.1} parent=1 // pred_fallthru
      _
    // Predicated region
    $region22: #{tpu_custom_call.1} parent=1 // pred_check
      _
    $region23: #{tpu_custom_call.1} parent=1 // pred_check_branch
      %921 = sbr.rel (0) target = $region25
    $region24: #{tpu_custom_call.1} parent=1 // pred_region
      %922 = dma.done [#allocation4], 128
    $region25: #{tpu_custom_call.1} parent=1 // pred_fallthru
      _
    %923 = vsyncpa [#allocation3], 1
    %924 = vsyncpa [#allocation6], 1
    %925 = vsyncpa [#allocation4], 1

</llo_original>
